<compile_context>
chip_gen: v7x
topology: tpu7x:2x2x1
jax: 0.10.0
libtpu: 0.0.40
codegen_flags: <defaults>
</compile_context>

<pallas_src>
import functools

import jax
import jax.numpy as jnp
from jax.experimental import pallas as pl
from jax.experimental.pallas import tpu as pltpu


def _round_up(x: int, m: int) -> int:
    return (x + m - 1) // m * m


def _meta_embedding_kernel(inv_scale,
                           idx_ref,    # (TILE_N, M+1) int32   [elem_idx | meta_idx + NE]
                           w_ref,      # (TILE_N, M+1) float32 [1.0      | meta_weight  ]
                           table_ref,  # (NE+NM, D_pad) table dtype (VMEM-resident)
                           out_ref):   # (TILE_N, D_pad) float32
    k_dim = table_ref.shape[0]
    tile_n, m1 = idx_ref.shape

    idx = idx_ref[...]                                                   # (TILE_N, M+1)
    w = w_ref[...]                                                       # (TILE_N, M+1)
    iota_k = jax.lax.broadcasted_iota(jnp.int32, (tile_n, k_dim), 1)     # (TILE_N, K)

    # Combined one-hot-weighted gather matrix; slot 0 is the element term
    # (weight 1.0), slots 1..M are the meta terms.  Duplicate meta indices
    # within a row sum, matching the reference einsum.
    combined = jnp.where(idx[:, 0:1] == iota_k, w[:, 0:1], 0.0)
    for m in range(1, m1):  # tiny static unroll over num_meta_types slots
        combined = combined + jnp.where(idx[:, m:m + 1] == iota_k,
                                        w[:, m:m + 1], 0.0)

    # Single fused MXU matmul against the concatenated [E_element; E_meta] table.
    acc = jnp.dot(combined.astype(table_ref.dtype), table_ref[...],
                  preferred_element_type=jnp.float32)                    # (TILE_N, D_pad)
    out_ref[...] = (acc * inv_scale).astype(out_ref.dtype)


def meta_embedding_forward(element_indices,      # (B, S) int32
                           meta_indices_table,   # (num_element, M) int32
                           meta_weights_table,   # (num_element, M) float32
                           e_element_table,      # (num_element, D)
                           e_meta_table,         # (num_meta,    D)
                           num_meta_types,
                           *,
                           tile_n=512,
                           table_dtype=jnp.float32):  # set jnp.bfloat16 for v6e/v5e MXU speed
    b, s = element_indices.shape
    n_tok = b * s
    n_elem, d_model = e_element_table.shape
    n_meta = e_meta_table.shape[0]
    m = meta_indices_table.shape[1]
    m1 = m + 1

    # --- table preparation (concat element+meta tables, pad D for lane-dense stores) ---
    d_pad = _round_up(d_model, 128)
    table = jnp.concatenate(
        [e_element_table.astype(table_dtype), e_meta_table.astype(table_dtype)], axis=0)
    if d_pad != d_model:
        table = jnp.pad(table, ((0, 0), (0, d_pad - d_model)))
    k_dim = n_elem + n_meta                                              # contraction depth

    # --- glue: pure index-table lookups (no arithmetic) ---
    flat_idx = element_indices.reshape(n_tok).astype(jnp.int32)
    meta_idx = meta_indices_table[flat_idx].astype(jnp.int32) + n_elem   # shift into concat table
    meta_w = meta_weights_table[flat_idx].astype(jnp.float32)
    idx_all = jnp.concatenate([flat_idx[:, None], meta_idx], axis=1)                  # (N, M+1)
    w_all = jnp.concatenate([jnp.ones((n_tok, 1), jnp.float32), meta_w], axis=1)      # (N, M+1)

    # --- token tiling (VMEM use independent of B*S; re-derive tile_n for v7x's 64 MiB) ---
    tile_n = max(8, min(int(tile_n), _round_up(n_tok, 8)))
    n_pad = _round_up(n_tok, tile_n)
    if n_pad != n_tok:
        idx_all = jnp.pad(idx_all, ((0, n_pad - n_tok), (0, 0)))
        w_all = jnp.pad(w_all, ((0, n_pad - n_tok), (0, 0)))

    kernel = functools.partial(_meta_embedding_kernel,
                               1.0 / float(num_meta_types + 1))

    out = pl.pallas_call(
        kernel,
        out_shape=jax.ShapeDtypeStruct((n_pad, d_pad), jnp.float32),
        grid_spec=pltpu.PrefetchScalarGridSpec(
            num_scalar_prefetch=0,
            grid=(n_pad // tile_n,),
            in_specs=[
                pl.BlockSpec((tile_n, m1), lambda i: (i, 0)),       # indices (tiled)
                pl.BlockSpec((tile_n, m1), lambda i: (i, 0)),       # weights (tiled)
                pl.BlockSpec((k_dim, d_pad), lambda i: (0, 0)),     # table: VMEM-resident
            ],
            out_specs=pl.BlockSpec((tile_n, d_pad), lambda i: (i, 0)),
        ),
        compiler_params=pltpu.CompilerParams(
            dimension_semantics=("parallel",)),                     # megacore shard on v7x
    )(idx_all, w_all, table)

    return out[:n_tok, :d_model].reshape(b, s, d_model)


def _reference_forward(element_indices, meta_indices_table, meta_weights_table,
                       e_element_table, e_meta_table, num_meta_types):
    # Pure-JAX reference mirroring the PyTorch forward.
    e_element = e_element_table[element_indices]                         # (B, S, D)
    meta_index = meta_indices_table[element_indices]                     # (B, S, M)
    meta_weight = meta_weights_table[element_indices]                    # (B, S, M)
    e_meta = e_meta_table[meta_index]                                    # (B, S, M, D)
    e_meta_weighted = jnp.einsum("bsmd,bsm->bsd", e_meta, meta_weight)   # (B, S, D)
    return (e_element + e_meta_weighted) / (num_meta_types + 1)


if __name__ == "__main__":
    key = jax.random.PRNGKey(0)
    k1, k2, k3, k4, k5 = jax.random.split(key, 5)

    # Small shapes consistent with the module.
    num_element = 16
    num_meta = 12
    num_meta_types = 3          # M meta slots per element
    d_model = 32
    batch, seq = 2, 8
    init_embedding_std = 0.2

    # Deterministic parameter init (nn.init.normal_(weight, mean=0, std=0.2)).
    e_element_table = (init_embedding_std *
                       jax.random.normal(k1, (num_element, d_model), jnp.float32))
    e_meta_table = (init_embedding_std *
                    jax.random.normal(k2, (num_meta, d_model), jnp.float32))
    meta_indices_table = jax.random.randint(
        k3, (num_element, num_meta_types), 0, num_meta, dtype=jnp.int32)
    meta_weights_table = jax.random.uniform(
        k4, (num_element, num_meta_types), jnp.float32, 0.1, 1.0)

    element_indices = jax.random.randint(
        k5, (batch, seq), 0, num_element, dtype=jnp.int32)

    out = meta_embedding_forward(element_indices, meta_indices_table,
                                 meta_weights_table, e_element_table,
                                 e_meta_table, num_meta_types)
    out = jax.block_until_ready(out)

    ref = _reference_forward(element_indices, meta_indices_table,
                             meta_weights_table, e_element_table,
                             e_meta_table, num_meta_types)
    assert out.shape == (batch, seq, d_model)
    assert jnp.allclose(out, ref, atol=1e-5, rtol=1e-5)

    print("KERNEL_OK")
</pallas_src>

<mosaic_0001>
module attributes {stable_mosaic.version = 11 : i64} {
  func.func @_meta_embedding_kernel(%arg0: i32, %arg1: memref<16x4xi32, #tpu.memory_space<vmem>>, %arg2: memref<16x4xf32, #tpu.memory_space<vmem>>, %arg3: memref<28x128xf32, #tpu.memory_space<vmem>>, %arg4: memref<16x128xf32, #tpu.memory_space<vmem>>) attributes {dimension_semantics = [#tpu.dimension_semantics<parallel>], iteration_bounds = array<i64: 1>, scalar_prefetch = 0 : i64, scratch_operands = 0 : i64, tpu.core_type = #tpu.core_type<tc>, window_params = [{transform_indices = @transform_0, window_bounds = array<i64: 16, 4>}, {transform_indices = @transform_1, window_bounds = array<i64: 16, 4>}, {pipeline_mode = #tpu.pipeline_mode<synchronous>, transform_indices = @transform_2, window_bounds = array<i64: 28, 128>}, {transform_indices = @transform_3, window_bounds = array<i64: 16, 128>}]} {
    %c0 = arith.constant 0 : index
    %c0_0 = arith.constant 0 : index
    %0 = vector.load %arg1[%c0, %c0_0] : memref<16x4xi32, #tpu.memory_space<vmem>>, vector<16x4xi32>
    %c0_1 = arith.constant 0 : index
    %c0_2 = arith.constant 0 : index
    %1 = vector.load %arg2[%c0_1, %c0_2] : memref<16x4xf32, #tpu.memory_space<vmem>>, vector<16x4xf32>
    %2 = tpu.iota {dimensions = array<i32: 1>} : vector<16x28xi32>
    %3 = vector.extract_strided_slice %0 {offsets = [0, 0], sizes = [16, 1], strides = [1, 1]} : vector<16x4xi32> to vector<16x1xi32>
    %4 = vector.broadcast %3 : vector<16x1xi32> to vector<16x28xi32>
    %5 = arith.cmpi eq, %4, %2 : vector<16x28xi32>
    %6 = vector.extract_strided_slice %1 {offsets = [0, 0], sizes = [16, 1], strides = [1, 1]} : vector<16x4xf32> to vector<16x1xf32>
    %cst = arith.constant 0.000000e+00 : f32
    %7 = vector.shape_cast %6 : vector<16x1xf32> to vector<16x1xf32>
    %8 = vector.broadcast %7 : vector<16x1xf32> to vector<16x28xf32>
    %9 = vector.broadcast %cst : f32 to vector<16x28xf32>
    %10 = arith.select %5, %8, %9 : vector<16x28xi1>, vector<16x28xf32>
    %11 = vector.extract_strided_slice %0 {offsets = [0, 1], sizes = [16, 1], strides = [1, 1]} : vector<16x4xi32> to vector<16x1xi32>
    %12 = vector.broadcast %11 : vector<16x1xi32> to vector<16x28xi32>
    %13 = arith.cmpi eq, %12, %2 : vector<16x28xi32>
    %14 = vector.extract_strided_slice %1 {offsets = [0, 1], sizes = [16, 1], strides = [1, 1]} : vector<16x4xf32> to vector<16x1xf32>
    %cst_3 = arith.constant 0.000000e+00 : f32
    %15 = vector.shape_cast %14 : vector<16x1xf32> to vector<16x1xf32>
    %16 = vector.broadcast %15 : vector<16x1xf32> to vector<16x28xf32>
    %17 = vector.broadcast %cst_3 : f32 to vector<16x28xf32>
    %18 = arith.select %13, %16, %17 : vector<16x28xi1>, vector<16x28xf32>
    %19 = arith.addf %10, %18 : vector<16x28xf32>
    %20 = vector.extract_strided_slice %0 {offsets = [0, 2], sizes = [16, 1], strides = [1, 1]} : vector<16x4xi32> to vector<16x1xi32>
    %21 = vector.broadcast %20 : vector<16x1xi32> to vector<16x28xi32>
    %22 = arith.cmpi eq, %21, %2 : vector<16x28xi32>
    %23 = vector.extract_strided_slice %1 {offsets = [0, 2], sizes = [16, 1], strides = [1, 1]} : vector<16x4xf32> to vector<16x1xf32>
    %cst_4 = arith.constant 0.000000e+00 : f32
    %24 = vector.shape_cast %23 : vector<16x1xf32> to vector<16x1xf32>
    %25 = vector.broadcast %24 : vector<16x1xf32> to vector<16x28xf32>
    %26 = vector.broadcast %cst_4 : f32 to vector<16x28xf32>
    %27 = arith.select %22, %25, %26 : vector<16x28xi1>, vector<16x28xf32>
    %28 = arith.addf %19, %27 : vector<16x28xf32>
    %29 = vector.extract_strided_slice %0 {offsets = [0, 3], sizes = [16, 1], strides = [1, 1]} : vector<16x4xi32> to vector<16x1xi32>
    %30 = vector.broadcast %29 : vector<16x1xi32> to vector<16x28xi32>
    %31 = arith.cmpi eq, %30, %2 : vector<16x28xi32>
    %32 = vector.extract_strided_slice %1 {offsets = [0, 3], sizes = [16, 1], strides = [1, 1]} : vector<16x4xf32> to vector<16x1xf32>
    %cst_5 = arith.constant 0.000000e+00 : f32
    %33 = vector.shape_cast %32 : vector<16x1xf32> to vector<16x1xf32>
    %34 = vector.broadcast %33 : vector<16x1xf32> to vector<16x28xf32>
    %35 = vector.broadcast %cst_5 : f32 to vector<16x28xf32>
    %36 = arith.select %31, %34, %35 : vector<16x28xi1>, vector<16x28xf32>
    %37 = arith.addf %28, %36 : vector<16x28xf32>
    %c0_6 = arith.constant 0 : index
    %c0_7 = arith.constant 0 : index
    %38 = vector.load %arg3[%c0_6, %c0_7] : memref<28x128xf32, #tpu.memory_space<vmem>>, vector<28x128xf32>
    %cst_8 = arith.constant dense<0.000000e+00> : vector<16x128xf32>
    %39 = tpu.matmul %37, %38, %cst_8 {dimension_numbers = #tpu.dot_dimension_numbers<[1], [0], [0], [1], [0, 0, 1, 1], [], []>} : vector<16x28xf32>, vector<28x128xf32>, vector<16x128xf32> -> vector<16x128xf32>
    %cst_9 = arith.constant 2.500000e-01 : f32
    %40 = vector.broadcast %cst_9 : f32 to vector<16x128xf32>
    %41 = arith.mulf %39, %40 : vector<16x128xf32>
    %c0_10 = arith.constant 0 : index
    %c0_11 = arith.constant 0 : index
    %42 = vector.load %arg4[%c0_10, %c0_11] : memref<16x128xf32, #tpu.memory_space<vmem>>, vector<16x128xf32>
    tpu.vector_store %arg4[%c0_10, %c0_11], %41 {strides = array<i32>} : memref<16x128xf32, #tpu.memory_space<vmem>>, vector<16x128xf32>,
    return
  }
  func.func @transform_0(%arg0: i32) -> (i32, i32) {
    %c0_i32 = arith.constant 0 : i32
    %c0_i32_0 = arith.constant 0 : i32
    return %arg0, %c0_i32 : i32, i32
  }
  func.func @transform_1(%arg0: i32) -> (i32, i32) {
    %c0_i32 = arith.constant 0 : i32
    %c0_i32_0 = arith.constant 0 : i32
    return %arg0, %c0_i32 : i32, i32
  }
  func.func @transform_2(%arg0: i32) -> (i32, i32) {
    %c0_i32 = arith.constant 0 : i32
    %c0_i32_0 = arith.constant 0 : i32
    %c0_i32_1 = arith.constant 0 : i32
    return %c0_i32, %c0_i32_0 : i32, i32
  }
  func.func @transform_3(%arg0: i32) -> (i32, i32) {
    %c0_i32 = arith.constant 0 : i32
    %c0_i32_0 = arith.constant 0 : i32
    return %arg0, %c0_i32 : i32, i32
  }
}

</mosaic_0001>

<llo_original>
// kernel: tpu_custom_call.1
$region0: #{tpu_custom_call.1}
  #allocation0 [shape = 'u32[]', space=smem, size = 0x4, offset = 0x4, fixed_abs, tag = 'smem constant byte address 0x4 - core index']
  #allocation1 [shape = 'u32[144,128]{1,0:T(1,128)}', space=vmem, size = 0x12000, scoped, tag = 'internal scratch']
  %s0 = inlined_call_operand.vmem [shape: s32[16,4], index: 0, kind: input, shape index: {}]
  %s1 = inlined_call_operand.vmem [shape: f32[16,4], index: 1, kind: input, shape index: {}]
  %s2 = inlined_call_operand.vmem [shape: f32[28,128], index: 2, kind: input, shape index: {}]
  %s3 = inlined_call_operand.hbm [shape: f32[16,128], index: 3, kind: output, shape index: {}]
  %s4 = sld [smem:[#allocation0]]
  $region22: #{tpu_custom_call.1} parent=0
    _
  %s6 = ssub.s32 1, %s4
  %s7 = scalar_select 0, %s6, %s4
  $region1: #{tpu_custom_call.1} parent=0
    #allocation2 [shape = 'u8[8192]{0}', space=vmem, size = 0x2000, scoped, tag = 'output window, operand 0, single buffered']
    #allocation3 [shape = 's32[1]{0}', space=sflag, size = 0x4, scoped, tag = 'scoped memory for tpu_custom_call.1']
    %8 = vsyncpa [#allocation3], 0
    // Predicated region
    $region2: #{tpu_custom_call.1} parent=1 // pred_check
      _
    $region3: #{tpu_custom_call.1} parent=1 // pred_check_branch
      %10 = sbr.rel (0) target = $region5
    $region4: #{tpu_custom_call.1} parent=1 // pred_region
      _
    $region5: #{tpu_custom_call.1} parent=1 // pred_fallthru
      _
    // Predicated region
    $region6: #{tpu_custom_call.1} parent=1 // pred_check
      _
    $region7: #{tpu_custom_call.1} parent=1 // pred_check_branch
      %12 = sbr.rel (0) target = $region9
    $region8: #{tpu_custom_call.1} parent=1 // pred_region
      _
    $region9: #{tpu_custom_call.1} parent=1 // pred_fallthru
      _
    // Predicated region
    $region10: #{tpu_custom_call.1} parent=1 // pred_check
      _
    $region11: #{tpu_custom_call.1} parent=1 // pred_check_branch
      %14 = sbr.rel (0) target = $region13
    $region12: #{tpu_custom_call.1} parent=1 // pred_region
      _
    $region13: #{tpu_custom_call.1} parent=1 // pred_fallthru
      _
    %v15 = vld [vmem:[%s0] sm:$0xff]
    %v16 = vld [vmem:[%s0 + $0x8] sm:$0xff]
    %v17 = vld [vmem:[%s1] sm:$0xff]
    %v18 = vld [vmem:[%s1 + $0x8] sm:$0xff]
    %v19 = vlaneseq
    %v20 = vand.u32 %v19, 127
    %21 = vset.pattern.permute.xlu0 0
    %22 = vperm.xlu0 %21, %v15
    %v23 = vpop.permute.xlu0 %22
    %24 = vset.pattern.permute.xlu0 0
    %25 = vperm.xlu0 %24, %v16
    %v26 = vpop.permute.xlu0 %25
    %vm27 = vcmp.eq.s32.totalorder %v23, %v20
    %vm28 = vcmp.eq.s32.totalorder %v26, %v20
    %30 = vset.pattern.permute.xlu0 0
    %31 = vperm.xlu0 %30, %v17
    %v32 = vpop.permute.xlu0 %31
    %35 = vset.pattern.permute.xlu0 0
    %36 = vperm.xlu0 %35, %v18
    %v37 = vpop.permute.xlu0 %36
    %v39 = vsel %vm27, %v32, 0.0
    %v40 = vsel %vm28, %v37, 0.0
    %41 = vset.pattern.permute.xlu0 1
    %42 = vperm.xlu0 %41, %v15
    %v43 = vpop.permute.xlu0 %42
    %44 = vset.pattern.permute.xlu0 1
    %45 = vperm.xlu0 %44, %v16
    %v46 = vpop.permute.xlu0 %45
    %vm47 = vcmp.eq.s32.totalorder %v43, %v20
    %vm48 = vcmp.eq.s32.totalorder %v46, %v20
    %49 = vset.pattern.permute.xlu0 1
    %50 = vperm.xlu0 %49, %v17
    %v51 = vpop.permute.xlu0 %50
    %53 = vset.pattern.permute.xlu0 1
    %54 = vperm.xlu0 %53, %v18
    %v55 = vpop.permute.xlu0 %54
    %v57 = vsel %vm47, %v51, 0.0
    %v58 = vsel %vm48, %v55, 0.0
    %v59 = vadd.f32 %v39, %v57
    %v60 = vadd.f32 %v40, %v58
    %61 = vset.pattern.permute.xlu0 2
    %62 = vperm.xlu0 %61, %v15
    %v63 = vpop.permute.xlu0 %62
    %64 = vset.pattern.permute.xlu0 2
    %65 = vperm.xlu0 %64, %v16
    %v66 = vpop.permute.xlu0 %65
    %vm67 = vcmp.eq.s32.totalorder %v63, %v20
    %vm68 = vcmp.eq.s32.totalorder %v66, %v20
    %69 = vset.pattern.permute.xlu0 2
    %70 = vperm.xlu0 %69, %v17
    %v71 = vpop.permute.xlu0 %70
    %73 = vset.pattern.permute.xlu0 2
    %74 = vperm.xlu0 %73, %v18
    %v75 = vpop.permute.xlu0 %74
    %v77 = vsel %vm67, %v71, 0.0
    %v78 = vsel %vm68, %v75, 0.0
    %v79 = vadd.f32 %v59, %v77
    %v80 = vadd.f32 %v60, %v78
    %81 = vset.pattern.permute.xlu0 3
    %82 = vperm.xlu0 %81, %v15
    %v83 = vpop.permute.xlu0 %82
    %84 = vset.pattern.permute.xlu0 3
    %85 = vperm.xlu0 %84, %v16
    %v86 = vpop.permute.xlu0 %85
    %vm87 = vcmp.eq.s32.totalorder %v83, %v20
    %vm88 = vcmp.eq.s32.totalorder %v86, %v20
    %89 = vset.pattern.permute.xlu0 3
    %90 = vperm.xlu0 %89, %v17
    %v91 = vpop.permute.xlu0 %90
    %93 = vset.pattern.permute.xlu0 3
    %94 = vperm.xlu0 %93, %v18
    %v95 = vpop.permute.xlu0 %94
    %v97 = vsel %vm87, %v91, 0.0
    %v98 = vsel %vm88, %v95, 0.0
    %v99 = vadd.f32 %v79, %v97
    %v100 = vadd.f32 %v80, %v98
    %v101 = vld [vmem:[%s2] sm:$0xff]
    %v102 = vld [vmem:[%s2 + $0x8] sm:$0xff]
    %v103 = vld [vmem:[%s2 + $0x10] sm:$0xff]
    %v104 = vld [vmem:[%s2 + $0x18] sm:$0xf]
    %vm105 = vcmask 228352
    %v107 = vsel %vm105, %v99, 0
    %v110 = vsel %vm105, %v100, 0
    %vm112 = vcmask 1043456
    %v114 = vsel %vm112, %v104, 0
    %116 = vmatprep.subr.mxu0 0.0
    %117 = vmatpush1.msra.mxu0 %v101
    %118 = vmatprep.subr.mxu0 0.0
    %119 = vmatpush1.msra.mxu0 %v102
    %120 = vmatprep.subr.mxu0 0.0
    %121 = vmatpush1.msra.mxu0 %v103
    %122 = vmatprep.subr.mxu0 0.0
    %123 = vmatpush1.msra.mxu0 %v114
    %124 = vmatprep.subr.mxu0 0.0
    %125 = vmatpush1.msra.mxu0 0.0
    %126 = vmatprep.subr.mxu0 0.0
    %127 = vmatpush1.msra.mxu0 0.0
    %128 = vmatprep.subr.mxu0 0.0
    %129 = vmatpush1.msra.mxu0 0.0
    %130 = vmatprep.subr.mxu0 0.0
    %131 = vmatpush1.msra.mxu0 0.0
    %132 = vmatprep.subr.mxu0 0.0
    %133 = vmatpush1.msra.mxu0 0.0
    %134 = vmatprep.subr.mxu0 0.0
    %135 = vmatpush1.msra.mxu0 0.0
    %136 = vmatprep.subr.mxu0 0.0
    %137 = vmatpush1.msra.mxu0 0.0
    %138 = vmatprep.subr.mxu0 0.0
    %139 = vmatpush1.msra.mxu0 0.0
    %140 = vmatprep.subr.mxu0 0.0
    %141 = vmatpush1.msra.mxu0 0.0
    %142 = vmatprep.subr.mxu0 0.0
    %143 = vmatpush1.msra.mxu0 0.0
    %144 = vmatprep.subr.mxu0 0.0
    %145 = vmatpush1.msra.mxu0 0.0
    %146 = vmatprep.subr.mxu0 0.0
    %147 = vmatpush1.msra.mxu0 0.0
    %148 = vmatprep.subr.mxu0 0.0
    %149 = vmatpush1.msra.mxu0 0.0
    %150 = vmatprep.subr.mxu0 0.0
    %151 = vmatpush1.msra.mxu0 0.0
    %152 = vmatprep.subr.mxu0 0.0
    %153 = vmatpush1.msra.mxu0 0.0
    %154 = vmatprep.subr.mxu0 0.0
    %155 = vmatpush1.msra.mxu0 0.0
    %156 = vmatprep.subr.mxu0 0.0
    %157 = vmatpush1.msra.mxu0 0.0
    %158 = vmatprep.subr.mxu0 0.0
    %159 = vmatpush1.msra.mxu0 0.0
    %160 = vmatprep.subr.mxu0 0.0
    %161 = vmatpush1.msra.mxu0 0.0
    %162 = vmatprep.subr.mxu0 0.0
    %163 = vmatpush1.msra.mxu0 0.0
    %164 = vmatprep.subr.mxu0 0.0
    %165 = vmatpush1.msra.mxu0 0.0
    %166 = vmatprep.subr.mxu0 0.0
    %167 = vmatpush1.msra.mxu0 0.0
    %168 = vmatprep.subr.mxu0 0.0
    %169 = vmatpush1.msra.mxu0 0.0
    %170 = vmatprep.subr.mxu0 0.0
    %171 = vmatpush1.msra.mxu0 0.0
    %172 = vmatprep.subr.mxu0 0.0
    %173 = vmatpush1.msra.mxu0 0.0
    %174 = vmatprep.subr.mxu0 0.0
    %175 = vmatpush1.msra.mxu0 0.0
    %176 = vmatprep.subr.mxu0 0.0
    %177 = vmatpush1.msra.mxu0 0.0
    %178 = vmatprep.subr.mxu0 0.0
    %179 = vmatpush1.msra.mxu0 0.0
    %180 = vmatprep.mubr.f32.mxu0 0.0
    %181 = vmatmul.mubr.f32.gmra.mrb[0].mxu0 %v107
    %v182 = vpop.f32.mrb[0].mxu0
    %v183 = vadd.f32 0.0, %v182
    %v184 = vpop.f32.mrb[0].mxu0
    %185 = vmatprep.mubr.f32.mxu0 0.0
    %186 = vmatmul.mubr.f32.gmra.mrb[0].mxu0 %v110
    %v187 = vpop.f32.mrb[0].mxu0
    %v188 = vadd.f32 0.0, %v187
    %v189 = vpop.f32.mrb[0].mxu0
    %190 = vdwg.mxu0
    %v191 = vmul.f32 %v183, 0.25
    %v192 = vmul.f32 %v188, 0.25
    %193 = vst [vmem:[#allocation2] sm:$0xff] %v191
    %194 = vst [vmem:[#allocation2 + $0x8] sm:$0xff] %v192
    // Predicated region
    $region14: #{tpu_custom_call.1} parent=1 // pred_check
      _
    $region15: #{tpu_custom_call.1} parent=1 // pred_check_branch
      %196 = sbr.rel (0) target = $region17
    $region16: #{tpu_custom_call.1} parent=1 // pred_region
      %s198 = ssub.s32 256, 256
      %199 = vsyncadd [#allocation3], %s198
      %s200 = sshll.u32 [#allocation2], 4
      %s201 = int_to_ptr.vmem [resolvable:$true] %s200
      %206 = dma.vmem_to_hbm [thread:$0]  %s201, 256, %s3, [#allocation3], 128, 128, 8
    $region17: #{tpu_custom_call.1} parent=1 // pred_fallthru
      _
    // Predicated region
    $region18: #{tpu_custom_call.1} parent=1 // pred_check
      _
    $region19: #{tpu_custom_call.1} parent=1 // pred_check_branch
      %208 = sbr.rel (0) target = $region21
    $region20: #{tpu_custom_call.1} parent=1 // pred_region
      %209 = dma.done [#allocation3], 256
    $region21: #{tpu_custom_call.1} parent=1 // pred_fallthru
      _
    %210 = vsyncpa [#allocation3], 1

</llo_original>
